<compile_context>
chip_gen: v6e
topology: v6e:2x2x1
jax: 0.10.0
libtpu: 0.0.40
codegen_flags: <defaults>
</compile_context>

<pallas_src>
import numpy as np
import jax
import jax.numpy as jnp
from jax.experimental import pallas as pl
from jax.experimental.pallas import tpu as pltpu


# ---------------------------------------------------------------------------
# In-kernel helpers
# ---------------------------------------------------------------------------
def _sigmoid(a):
    # 1/(1+exp(-a)) expressed via tanh: the transcendental goes to the EUP
    # (otherwise-idle VLIW slot) and no f32 divide lands on the VALU.
    return 0.5 * jnp.tanh(0.5 * a) + 0.5


def _gru_gates(gx, gh, h_prev, bh_n):
    """PyTorch-semantics GRU gate math given precomputed gate pre-activations.

    gx:   (B, 3H) input-path gates, r/z biases already folded in, n has b_in.
    gh:   (B, 3H) hidden-path gates, no bias.
    bh_n: (1, H)  hidden-path bias of the n gate (kept separate because of the
          r * (W_hn h + b_hn) term).
    """
    H = h_prev.shape[-1]
    r = _sigmoid(gx[:, 0:H] + gh[:, 0:H])
    z = _sigmoid(gx[:, H:2 * H] + gh[:, H:2 * H])
    n = jnp.tanh(gx[:, 2 * H:3 * H] + r * (gh[:, 2 * H:3 * H] + bh_n))
    return (1.0 - z) * n + z * h_prev


# ---------------------------------------------------------------------------
# Single fused kernel: folded-embedding gx0 + 2-layer GRU + fused fc1/fc3 proj
# ---------------------------------------------------------------------------
def rnn_kernel(x_ref, e0_ref, h_ref,
               wh0_ref, bg0_ref, bn0_ref,
               wblk1_ref, bg1_ref, bn1_ref,
               weff_ref, b3_ref,
               out_ref, hn_ref):
    TS = x_ref.shape[0]                       # T * S flattened token count
    V = e0_ref.shape[0]
    S = h_ref.shape[1]
    H = h_ref.shape[2]
    T = TS // S
    H3 = 3 * H

    # Layer-0 input path for ALL time steps at once:
    #   gx0_all = onehot(x) @ (emb @ W_ih_l0.T) + bg0
    # One MXU op replaces the separate embedding-gather matmul plus T per-step
    # layer-0 input matmuls (embedding table folded into E0 offline; exact for
    # f32 one-hot weights, no HBM gather round trip).
    onehot = (x_ref[...] ==
              jax.lax.broadcasted_iota(jnp.int32, (TS, V), 1)).astype(jnp.float32)
    gx0_all = jnp.dot(onehot, e0_ref[...],
                      preferred_element_type=jnp.float32) + bg0_ref[...]   # (T*S, 3H)

    # Load weights once (tiny, lives comfortably in vregs across the unroll).
    wh0 = wh0_ref[...]; bn0 = bn0_ref[...]
    wblk1 = wblk1_ref[...]; bg1 = bg1_ref[...]; bn1 = bn1_ref[...]

    h0 = h_ref[0]
    h1 = h_ref[1]
    outs = []
    for t in range(T):   # T (= BATCH_SIZE) is tiny & static -> unrolled
        # ---- layer 0: only the hidden-path matmul remains on the chain.
        gx0 = gx0_all[t * S:(t + 1) * S, :]
        gh0 = jnp.dot(h0, wh0, preferred_element_type=jnp.float32)         # (S, 3H)
        h0 = _gru_gates(gx0, gh0, h0, bn0)
        # ---- layer 1: gx|gh fused into ONE matmul via block-diag weight.
        g1 = jnp.dot(jnp.concatenate([h0, h1], axis=1), wblk1,
                     preferred_element_type=jnp.float32)                   # (S, 6H)
        gx1 = g1[:, :H3] + bg1
        gh1 = g1[:, H3:]
        h1 = _gru_gates(gx1, gh1, h1, bn1)
        outs.append(h1)

    # Single lane-dense store of the whole projected output:
    #   out = outputs @ (Cats @ W_fc3.T) + b_fc3
    hs = jnp.concatenate(outs, axis=0)                                     # (T*S, H)
    out_ref[...] = jnp.dot(hs, weff_ref[...],
                           preferred_element_type=jnp.float32) + b3_ref[...]
    hn_ref[0] = h0
    hn_ref[1] = h1


def rnn_net_forward(x, hidden, kp):
    """Pallas forward equivalent of RNN_net.forward(x, hidden)."""
    T, S = x.shape
    H = hidden.shape[2]
    V = kp["w_eff"].shape[1]
    TS = T * S
    x_2d = x.reshape(TS, 1).astype(jnp.int32)

    # Advisory cost hint (latency-bound tiny kernel; helps XLA's scheduler).
    flops = (2 * TS * V * 3 * H                       # gx0_all (one-hot fold)
             + T * (2 * S * H * 3 * H                 # layer-0 gh per step
                    + 2 * S * (2 * H) * (6 * H))      # fused layer-1 per step
             + 2 * TS * H * V)                        # output projection
    transcendentals = 3 * S * H * 2 * T               # 3 tanh / cell / element
    bytes_accessed = 4 * (int(x_2d.size) + int(hidden.size) + TS * V + 2 * S * H
                          + sum(int(np.prod(v.shape)) for v in kp.values()))

    vmem = pl.BlockSpec(memory_space=pltpu.MemorySpace.VMEM)
    out_flat, hn = pl.pallas_call(
        rnn_kernel,
        out_shape=(jax.ShapeDtypeStruct((TS, V), jnp.float32),
                   jax.ShapeDtypeStruct((2, S, H), jnp.float32)),
        in_specs=[vmem] * 11,
        out_specs=(vmem, vmem),
        # hidden (input 2) has the same shape/dtype as hn (output 1): reuse it.
        # Safe: h_ref is fully read into registers before hn_ref is written.
        input_output_aliases={2: 1},
        cost_estimate=pl.CostEstimate(flops=flops,
                                      transcendentals=transcendentals,
                                      bytes_accessed=bytes_accessed),
    )(x_2d, kp["e0"], hidden,
      kp["wh0"], kp["bg0"], kp["bn0"],
      kp["wblk1"], kp["bg1"], kp["bn1"],
      kp["w_eff"], kp["b3"])
    return out_flat.reshape(T, S, V), hn


# ---------------------------------------------------------------------------
# Parameter handling (PyTorch layout -> kernel layout) and pure-JAX reference
# ---------------------------------------------------------------------------
def init_torch_params(key, V, H, Hd, N0, N1):
    """Parameters in exact PyTorch layout (rows = out features, gates [r,z,n])."""
    ks = jax.random.split(key, 16)

    def u(k, shape, bound):
        return jax.random.uniform(k, shape, jnp.float32, -bound, bound)

    kg = 1.0 / np.sqrt(H)      # nn.GRU init bound
    k1 = 1.0 / np.sqrt(N1)     # fc1 init bound
    k3 = 1.0 / np.sqrt(N0)     # fc3 init bound
    return dict(
        embedding=jax.random.normal(ks[0], (V, H), jnp.float32),
        w_ih_l0=u(ks[1], (3 * H, H), kg), w_hh_l0=u(ks[2], (3 * H, H), kg),
        b_ih_l0=u(ks[3], (3 * H,), kg), b_hh_l0=u(ks[4], (3 * H,), kg),
        w_ih_l1=u(ks[5], (3 * H, H), kg), w_hh_l1=u(ks[6], (3 * H, H), kg),
        b_ih_l1=u(ks[7], (3 * H,), kg), b_hh_l1=u(ks[8], (3 * H,), kg),
        w1=u(ks[9], (Hd, N1), k1), b1=u(ks[10], (Hd,), k1),
        w3=u(ks[11], (V, N0), k3), b3=u(ks[12], (V,), k3),
        x_cat=jax.random.normal(ks[13], (N0, N1), jnp.float32),
    )


def prepare_kernel_params(tp):
    """One-time (parameter-only) JAX glue:
      * fold embedding table into layer-0 input weights: E0 = emb @ W_ih_l0.T
      * fold r/z biases of input & hidden paths together
      * build block-diagonal layer-1 weight [[wi1,0],[0,wh1]] for gx|gh fusion
      * collapse fc1(x_cat).T followed by fc3 into a single (H, V) matrix.
    """
    H = tp["embedding"].shape[1]

    def fold_biases(b_ih, b_hh):
        bg = jnp.concatenate([b_ih[:2 * H] + b_hh[:2 * H],    # r,z folded
                              b_ih[2 * H:]]).reshape(1, 3 * H)  # n (input)
        bn = b_hh[2 * H:].reshape(1, H)                         # n (hidden)
        return bg, bn

    # Layer 0: embedding folded into the input-path weights.
    wi0 = tp["w_ih_l0"].T                                     # (H, 3H)
    e0 = tp["embedding"] @ wi0                                 # (V, 3H)
    wh0 = tp["w_hh_l0"].T                                      # (H, 3H)
    bg0, bn0 = fold_biases(tp["b_ih_l0"], tp["b_hh_l0"])

    # Layer 1: block-diagonal stack so gx and gh come from ONE matmul.
    wi1 = tp["w_ih_l1"].T                                      # (H, 3H)
    wh1 = tp["w_hh_l1"].T                                      # (H, 3H)
    zero = jnp.zeros((H, 3 * H), jnp.float32)
    wblk1 = jnp.concatenate(
        [jnp.concatenate([wi1, zero], axis=1),
         jnp.concatenate([zero, wh1], axis=1)], axis=0)        # (2H, 6H)
    bg1, bn1 = fold_biases(tp["b_ih_l1"], tp["b_hh_l1"])

    cats = (tp["x_cat"] @ tp["w1"].T + tp["b1"]).T             # (H, N0)
    w_eff = cats @ tp["w3"].T                                  # (H, V)
    b3 = tp["b3"].reshape(1, -1)                               # (1, V)
    return dict(e0=e0, wh0=wh0, bg0=bg0, bn0=bn0,
                wblk1=wblk1, bg1=bg1, bn1=bn1,
                w_eff=w_eff, b3=b3)


def _torch_gru_cell(x, h, w_ih, w_hh, b_ih, b_hh):
    """Literal PyTorch GRU cell math (per-gate, un-folded) for reference."""
    H = h.shape[-1]
    gi = x @ w_ih.T + b_ih
    gh = h @ w_hh.T + b_hh
    r = 1.0 / (1.0 + jnp.exp(-(gi[:, :H] + gh[:, :H])))
    z = 1.0 / (1.0 + jnp.exp(-(gi[:, H:2 * H] + gh[:, H:2 * H])))
    n = jnp.tanh(gi[:, 2 * H:] + r * gh[:, 2 * H:])
    return (1.0 - z) * n + z * h


def reference_forward(x, hidden, tp):
    """Pure-JAX reference with the original PyTorch op ordering."""
    emb = tp["embedding"][x]                                   # (T, S, H)
    T = emb.shape[0]
    h0, h1 = hidden[0], hidden[1]
    outs = []
    for t in range(T):
        h0 = _torch_gru_cell(emb[t], h0, tp["w_ih_l0"], tp["w_hh_l0"],
                             tp["b_ih_l0"], tp["b_hh_l0"])
        h1 = _torch_gru_cell(h0, h1, tp["w_ih_l1"], tp["w_hh_l1"],
                             tp["b_ih_l1"], tp["b_hh_l1"])
        outs.append(h1)
    outputs = jnp.stack(outs)                                  # (T, S, H)
    cats = (tp["x_cat"] @ tp["w1"].T + tp["b1"]).T             # (H, N0)
    ht = outputs @ cats                                        # (T, S, N0)
    out = ht @ tp["w3"].T + tp["b3"]                           # (T, S, V)
    return out, jnp.stack([h0, h1])


if __name__ == "__main__":
    # Small shapes consistent with the module. embedding_size must equal
    # hidden_size for `outputs @ Cats` to be shape-valid (as in the original).
    num_embeddings = 32     # V
    embedding_size = 16     # H (= GRU input & hidden size)
    hidden_size = 16        # Hd (must equal embedding_size)
    BATCH_SIZE = 2          # GRU time axis (see layout comment)
    seq_len = 8             # GRU batch axis
    N0, N1 = 8, 16          # x_cat shape -> fc1: Linear(16,16), fc3: Linear(8,32)

    key = jax.random.PRNGKey(0)
    kparam, kx = jax.random.split(key)
    tp = init_torch_params(kparam, num_embeddings, embedding_size, hidden_size, N0, N1)
    kp = prepare_kernel_params(tp)

    x = jax.random.randint(kx, (BATCH_SIZE, seq_len), 0, num_embeddings,
                           dtype=jnp.int32)
    hidden = jnp.zeros((2, seq_len, embedding_size), jnp.float32)     # init_hidden()

    out, hn = rnn_net_forward(x, hidden, kp)
    out, hn = jax.block_until_ready((out, hn))

    ref_out, ref_hn = reference_forward(x, hidden, tp)
    assert out.shape == (BATCH_SIZE, seq_len, num_embeddings)
    assert hn.shape == (2, seq_len, embedding_size)
    assert np.allclose(np.asarray(out), np.asarray(ref_out), atol=1e-4, rtol=1e-4)
    assert np.allclose(np.asarray(hn), np.asarray(ref_hn), atol=1e-4, rtol=1e-4)
    print("KERNEL_OK")
</pallas_src>

<mosaic_0001>
module attributes {stable_mosaic.version = 11 : i64} {
  func.func @rnn_kernel(%arg0: memref<16x1xi32, #tpu.memory_space<vmem>>, %arg1: memref<32x48xf32, #tpu.memory_space<vmem>>, %arg2: memref<2x8x16xf32, #tpu.memory_space<vmem>>, %arg3: memref<16x48xf32, #tpu.memory_space<vmem>>, %arg4: memref<1x48xf32, #tpu.memory_space<vmem>>, %arg5: memref<1x16xf32, #tpu.memory_space<vmem>>, %arg6: memref<32x96xf32, #tpu.memory_space<vmem>>, %arg7: memref<1x48xf32, #tpu.memory_space<vmem>>, %arg8: memref<1x16xf32, #tpu.memory_space<vmem>>, %arg9: memref<16x32xf32, #tpu.memory_space<vmem>>, %arg10: memref<1x32xf32, #tpu.memory_space<vmem>>, %arg11: memref<16x32xf32, #tpu.memory_space<vmem>>, %arg12: memref<2x8x16xf32, #tpu.memory_space<vmem>>) attributes {dimension_semantics = [], scalar_prefetch = 0 : i64, scratch_operands = 0 : i64, tpu.core_type = #tpu.core_type<tc>} {
    %c0 = arith.constant 0 : index
    %c0_0 = arith.constant 0 : index
    %0 = vector.load %arg0[%c0, %c0_0] : memref<16x1xi32, #tpu.memory_space<vmem>>, vector<16x1xi32>
    %1 = tpu.iota {dimensions = array<i32: 1>} : vector<16x32xi32>
    %2 = vector.broadcast %0 : vector<16x1xi32> to vector<16x32xi32>
    %3 = arith.cmpi eq, %2, %1 : vector<16x32xi32>
    %4 = arith.extui %3 : vector<16x32xi1> to vector<16x32xi32>
    %5 = arith.sitofp %4 : vector<16x32xi32> to vector<16x32xf32>
    %c0_1 = arith.constant 0 : index
    %c0_2 = arith.constant 0 : index
    %6 = vector.load %arg1[%c0_1, %c0_2] : memref<32x48xf32, #tpu.memory_space<vmem>>, vector<32x48xf32>
    %cst = arith.constant dense<0.000000e+00> : vector<16x48xf32>
    %7 = tpu.matmul %5, %6, %cst {dimension_numbers = #tpu.dot_dimension_numbers<[1], [0], [0], [1], [0, 0, 1, 1], [], []>} : vector<16x32xf32>, vector<32x48xf32>, vector<16x48xf32> -> vector<16x48xf32>
    %c0_3 = arith.constant 0 : index
    %c0_4 = arith.constant 0 : index
    %8 = vector.load %arg4[%c0_3, %c0_4] : memref<1x48xf32, #tpu.memory_space<vmem>>, vector<1x48xf32>
    %9 = vector.broadcast %8 : vector<1x48xf32> to vector<16x48xf32>
    %10 = arith.addf %7, %9 : vector<16x48xf32>
    %c0_5 = arith.constant 0 : index
    %c0_6 = arith.constant 0 : index
    %11 = vector.load %arg3[%c0_5, %c0_6] : memref<16x48xf32, #tpu.memory_space<vmem>>, vector<16x48xf32>
    %c0_7 = arith.constant 0 : index
    %c0_8 = arith.constant 0 : index
    %12 = vector.load %arg5[%c0_7, %c0_8] : memref<1x16xf32, #tpu.memory_space<vmem>>, vector<1x16xf32>
    %c0_9 = arith.constant 0 : index
    %c0_10 = arith.constant 0 : index
    %13 = vector.load %arg6[%c0_9, %c0_10] : memref<32x96xf32, #tpu.memory_space<vmem>>, vector<32x96xf32>
    %c0_11 = arith.constant 0 : index
    %c0_12 = arith.constant 0 : index
    %14 = vector.load %arg7[%c0_11, %c0_12] : memref<1x48xf32, #tpu.memory_space<vmem>>, vector<1x48xf32>
    %c0_13 = arith.constant 0 : index
    %c0_14 = arith.constant 0 : index
    %15 = vector.load %arg8[%c0_13, %c0_14] : memref<1x16xf32, #tpu.memory_space<vmem>>, vector<1x16xf32>
    %c0_15 = arith.constant 0 : index
    %c0_16 = arith.constant 0 : index
    %c0_17 = arith.constant 0 : index
    %16 = vector.load %arg2[%c0_15, %c0_16, %c0_17] : memref<2x8x16xf32, #tpu.memory_space<vmem>>, vector<1x8x16xf32>
    %17 = vector.shape_cast %16 : vector<1x8x16xf32> to vector<8x16xf32>
    %c1 = arith.constant 1 : index
    %c0_18 = arith.constant 0 : index
    %c0_19 = arith.constant 0 : index
    %18 = vector.load %arg2[%c1, %c0_18, %c0_19] : memref<2x8x16xf32, #tpu.memory_space<vmem>>, vector<1x8x16xf32>
    %19 = vector.shape_cast %18 : vector<1x8x16xf32> to vector<8x16xf32>
    %20 = vector.extract_strided_slice %10 {offsets = [0, 0], sizes = [8, 48], strides = [1, 1]} : vector<16x48xf32> to vector<8x48xf32>
    %cst_20 = arith.constant dense<0.000000e+00> : vector<8x48xf32>
    %21 = tpu.matmul %17, %11, %cst_20 {dimension_numbers = #tpu.dot_dimension_numbers<[1], [0], [0], [1], [0, 0, 1, 1], [], []>} : vector<8x16xf32>, vector<16x48xf32>, vector<8x48xf32> -> vector<8x48xf32>
    %22 = vector.extract_strided_slice %20 {offsets = [0, 0], sizes = [8, 16], strides = [1, 1]} : vector<8x48xf32> to vector<8x16xf32>
    %23 = vector.extract_strided_slice %21 {offsets = [0, 0], sizes = [8, 16], strides = [1, 1]} : vector<8x48xf32> to vector<8x16xf32>
    %24 = arith.addf %22, %23 : vector<8x16xf32>
    %cst_21 = arith.constant 5.000000e-01 : f32
    %25 = vector.broadcast %cst_21 : f32 to vector<8x16xf32>
    %26 = arith.mulf %25, %24 : vector<8x16xf32>
    %27 = math.tanh %26 : vector<8x16xf32>
    %cst_22 = arith.constant 5.000000e-01 : f32
    %28 = vector.broadcast %cst_22 : f32 to vector<8x16xf32>
    %29 = arith.mulf %28, %27 : vector<8x16xf32>
    %cst_23 = arith.constant 5.000000e-01 : f32
    %30 = vector.broadcast %cst_23 : f32 to vector<8x16xf32>
    %31 = arith.addf %29, %30 : vector<8x16xf32>
    %32 = vector.extract_strided_slice %20 {offsets = [0, 16], sizes = [8, 16], strides = [1, 1]} : vector<8x48xf32> to vector<8x16xf32>
    %33 = vector.extract_strided_slice %21 {offsets = [0, 16], sizes = [8, 16], strides = [1, 1]} : vector<8x48xf32> to vector<8x16xf32>
    %34 = arith.addf %32, %33 : vector<8x16xf32>
    %cst_24 = arith.constant 5.000000e-01 : f32
    %35 = vector.broadcast %cst_24 : f32 to vector<8x16xf32>
    %36 = arith.mulf %35, %34 : vector<8x16xf32>
    %37 = math.tanh %36 : vector<8x16xf32>
    %cst_25 = arith.constant 5.000000e-01 : f32
    %38 = vector.broadcast %cst_25 : f32 to vector<8x16xf32>
    %39 = arith.mulf %38, %37 : vector<8x16xf32>
    %cst_26 = arith.constant 5.000000e-01 : f32
    %40 = vector.broadcast %cst_26 : f32 to vector<8x16xf32>
    %41 = arith.addf %39, %40 : vector<8x16xf32>
    %42 = vector.extract_strided_slice %20 {offsets = [0, 32], sizes = [8, 16], strides = [1, 1]} : vector<8x48xf32> to vector<8x16xf32>
    %43 = vector.extract_strided_slice %21 {offsets = [0, 32], sizes = [8, 16], strides = [1, 1]} : vector<8x48xf32> to vector<8x16xf32>
    %44 = vector.broadcast %12 : vector<1x16xf32> to vector<8x16xf32>
    %45 = arith.addf %43, %44 : vector<8x16xf32>
    %46 = arith.mulf %31, %45 : vector<8x16xf32>
    %47 = arith.addf %42, %46 : vector<8x16xf32>
    %48 = math.tanh %47 : vector<8x16xf32>
    %cst_27 = arith.constant 1.000000e+00 : f32
    %49 = vector.broadcast %cst_27 : f32 to vector<8x16xf32>
    %50 = arith.subf %49, %41 : vector<8x16xf32>
    %51 = arith.mulf %50, %48 : vector<8x16xf32>
    %52 = arith.mulf %41, %17 : vector<8x16xf32>
    %53 = arith.addf %51, %52 : vector<8x16xf32>
    %54 = tpu.concatenate %53, %19 in 1 : vector<8x16xf32>, vector<8x16xf32> -> vector<8x32xf32>
    %cst_28 = arith.constant dense<0.000000e+00> : vector<8x96xf32>
    %55 = tpu.matmul %54, %13, %cst_28 {dimension_numbers = #tpu.dot_dimension_numbers<[1], [0], [0], [1], [0, 0, 1, 1], [], []>} : vector<8x32xf32>, vector<32x96xf32>, vector<8x96xf32> -> vector<8x96xf32>
    %56 = vector.extract_strided_slice %55 {offsets = [0, 0], sizes = [8, 48], strides = [1, 1]} : vector<8x96xf32> to vector<8x48xf32>
    %57 = vector.broadcast %14 : vector<1x48xf32> to vector<8x48xf32>
    %58 = arith.addf %56, %57 : vector<8x48xf32>
    %59 = vector.extract_strided_slice %55 {offsets = [0, 48], sizes = [8, 48], strides = [1, 1]} : vector<8x96xf32> to vector<8x48xf32>
    %60 = vector.extract_strided_slice %58 {offsets = [0, 0], sizes = [8, 16], strides = [1, 1]} : vector<8x48xf32> to vector<8x16xf32>
    %61 = vector.extract_strided_slice %59 {offsets = [0, 0], sizes = [8, 16], strides = [1, 1]} : vector<8x48xf32> to vector<8x16xf32>
    %62 = arith.addf %60, %61 : vector<8x16xf32>
    %cst_29 = arith.constant 5.000000e-01 : f32
    %63 = vector.broadcast %cst_29 : f32 to vector<8x16xf32>
    %64 = arith.mulf %63, %62 : vector<8x16xf32>
    %65 = math.tanh %64 : vector<8x16xf32>
    %cst_30 = arith.constant 5.000000e-01 : f32
    %66 = vector.broadcast %cst_30 : f32 to vector<8x16xf32>
    %67 = arith.mulf %66, %65 : vector<8x16xf32>
    %cst_31 = arith.constant 5.000000e-01 : f32
    %68 = vector.broadcast %cst_31 : f32 to vector<8x16xf32>
    %69 = arith.addf %67, %68 : vector<8x16xf32>
    %70 = vector.extract_strided_slice %58 {offsets = [0, 16], sizes = [8, 16], strides = [1, 1]} : vector<8x48xf32> to vector<8x16xf32>
    %71 = vector.extract_strided_slice %59 {offsets = [0, 16], sizes = [8, 16], strides = [1, 1]} : vector<8x48xf32> to vector<8x16xf32>
    %72 = arith.addf %70, %71 : vector<8x16xf32>
    %cst_32 = arith.constant 5.000000e-01 : f32
    %73 = vector.broadcast %cst_32 : f32 to vector<8x16xf32>
    %74 = arith.mulf %73, %72 : vector<8x16xf32>
    %75 = math.tanh %74 : vector<8x16xf32>
    %cst_33 = arith.constant 5.000000e-01 : f32
    %76 = vector.broadcast %cst_33 : f32 to vector<8x16xf32>
    %77 = arith.mulf %76, %75 : vector<8x16xf32>
    %cst_34 = arith.constant 5.000000e-01 : f32
    %78 = vector.broadcast %cst_34 : f32 to vector<8x16xf32>
    %79 = arith.addf %77, %78 : vector<8x16xf32>
    %80 = vector.extract_strided_slice %58 {offsets = [0, 32], sizes = [8, 16], strides = [1, 1]} : vector<8x48xf32> to vector<8x16xf32>
    %81 = vector.extract_strided_slice %59 {offsets = [0, 32], sizes = [8, 16], strides = [1, 1]} : vector<8x48xf32> to vector<8x16xf32>
    %82 = vector.broadcast %15 : vector<1x16xf32> to vector<8x16xf32>
    %83 = arith.addf %81, %82 : vector<8x16xf32>
    %84 = arith.mulf %69, %83 : vector<8x16xf32>
    %85 = arith.addf %80, %84 : vector<8x16xf32>
    %86 = math.tanh %85 : vector<8x16xf32>
    %cst_35 = arith.constant 1.000000e+00 : f32
    %87 = vector.broadcast %cst_35 : f32 to vector<8x16xf32>
    %88 = arith.subf %87, %79 : vector<8x16xf32>
    %89 = arith.mulf %88, %86 : vector<8x16xf32>
    %90 = arith.mulf %79, %19 : vector<8x16xf32>
    %91 = arith.addf %89, %90 : vector<8x16xf32>
    %92 = vector.extract_strided_slice %10 {offsets = [8, 0], sizes = [8, 48], strides = [1, 1]} : vector<16x48xf32> to vector<8x48xf32>
    %cst_36 = arith.constant dense<0.000000e+00> : vector<8x48xf32>
    %93 = tpu.matmul %53, %11, %cst_36 {dimension_numbers = #tpu.dot_dimension_numbers<[1], [0], [0], [1], [0, 0, 1, 1], [], []>} : vector<8x16xf32>, vector<16x48xf32>, vector<8x48xf32> -> vector<8x48xf32>
    %94 = vector.extract_strided_slice %92 {offsets = [0, 0], sizes = [8, 16], strides = [1, 1]} : vector<8x48xf32> to vector<8x16xf32>
    %95 = vector.extract_strided_slice %93 {offsets = [0, 0], sizes = [8, 16], strides = [1, 1]} : vector<8x48xf32> to vector<8x16xf32>
    %96 = arith.addf %94, %95 : vector<8x16xf32>
    %cst_37 = arith.constant 5.000000e-01 : f32
    %97 = vector.broadcast %cst_37 : f32 to vector<8x16xf32>
    %98 = arith.mulf %97, %96 : vector<8x16xf32>
    %99 = math.tanh %98 : vector<8x16xf32>
    %cst_38 = arith.constant 5.000000e-01 : f32
    %100 = vector.broadcast %cst_38 : f32 to vector<8x16xf32>
    %101 = arith.mulf %100, %99 : vector<8x16xf32>
    %cst_39 = arith.constant 5.000000e-01 : f32
    %102 = vector.broadcast %cst_39 : f32 to vector<8x16xf32>
    %103 = arith.addf %101, %102 : vector<8x16xf32>
    %104 = vector.extract_strided_slice %92 {offsets = [0, 16], sizes = [8, 16], strides = [1, 1]} : vector<8x48xf32> to vector<8x16xf32>
    %105 = vector.extract_strided_slice %93 {offsets = [0, 16], sizes = [8, 16], strides = [1, 1]} : vector<8x48xf32> to vector<8x16xf32>
    %106 = arith.addf %104, %105 : vector<8x16xf32>
    %cst_40 = arith.constant 5.000000e-01 : f32
    %107 = vector.broadcast %cst_40 : f32 to vector<8x16xf32>
    %108 = arith.mulf %107, %106 : vector<8x16xf32>
    %109 = math.tanh %108 : vector<8x16xf32>
    %cst_41 = arith.constant 5.000000e-01 : f32
    %110 = vector.broadcast %cst_41 : f32 to vector<8x16xf32>
    %111 = arith.mulf %110, %109 : vector<8x16xf32>
    %cst_42 = arith.constant 5.000000e-01 : f32
    %112 = vector.broadcast %cst_42 : f32 to vector<8x16xf32>
    %113 = arith.addf %111, %112 : vector<8x16xf32>
    %114 = vector.extract_strided_slice %92 {offsets = [0, 32], sizes = [8, 16], strides = [1, 1]} : vector<8x48xf32> to vector<8x16xf32>
    %115 = vector.extract_strided_slice %93 {offsets = [0, 32], sizes = [8, 16], strides = [1, 1]} : vector<8x48xf32> to vector<8x16xf32>
    %116 = vector.broadcast %12 : vector<1x16xf32> to vector<8x16xf32>
    %117 = arith.addf %115, %116 : vector<8x16xf32>
    %118 = arith.mulf %103, %117 : vector<8x16xf32>
    %119 = arith.addf %114, %118 : vector<8x16xf32>
    %120 = math.tanh %119 : vector<8x16xf32>
    %cst_43 = arith.constant 1.000000e+00 : f32
    %121 = vector.broadcast %cst_43 : f32 to vector<8x16xf32>
    %122 = arith.subf %121, %113 : vector<8x16xf32>
    %123 = arith.mulf %122, %120 : vector<8x16xf32>
    %124 = arith.mulf %113, %53 : vector<8x16xf32>
    %125 = arith.addf %123, %124 : vector<8x16xf32>
    %126 = tpu.concatenate %125, %91 in 1 : vector<8x16xf32>, vector<8x16xf32> -> vector<8x32xf32>
    %cst_44 = arith.constant dense<0.000000e+00> : vector<8x96xf32>
    %127 = tpu.matmul %126, %13, %cst_44 {dimension_numbers = #tpu.dot_dimension_numbers<[1], [0], [0], [1], [0, 0, 1, 1], [], []>} : vector<8x32xf32>, vector<32x96xf32>, vector<8x96xf32> -> vector<8x96xf32>
    %128 = vector.extract_strided_slice %127 {offsets = [0, 0], sizes = [8, 48], strides = [1, 1]} : vector<8x96xf32> to vector<8x48xf32>
    %129 = vector.broadcast %14 : vector<1x48xf32> to vector<8x48xf32>
    %130 = arith.addf %128, %129 : vector<8x48xf32>
    %131 = vector.extract_strided_slice %127 {offsets = [0, 48], sizes = [8, 48], strides = [1, 1]} : vector<8x96xf32> to vector<8x48xf32>
    %132 = vector.extract_strided_slice %130 {offsets = [0, 0], sizes = [8, 16], strides = [1, 1]} : vector<8x48xf32> to vector<8x16xf32>
    %133 = vector.extract_strided_slice %131 {offsets = [0, 0], sizes = [8, 16], strides = [1, 1]} : vector<8x48xf32> to vector<8x16xf32>
    %134 = arith.addf %132, %133 : vector<8x16xf32>
    %cst_45 = arith.constant 5.000000e-01 : f32
    %135 = vector.broadcast %cst_45 : f32 to vector<8x16xf32>
    %136 = arith.mulf %135, %134 : vector<8x16xf32>
    %137 = math.tanh %136 : vector<8x16xf32>
    %cst_46 = arith.constant 5.000000e-01 : f32
    %138 = vector.broadcast %cst_46 : f32 to vector<8x16xf32>
    %139 = arith.mulf %138, %137 : vector<8x16xf32>
    %cst_47 = arith.constant 5.000000e-01 : f32
    %140 = vector.broadcast %cst_47 : f32 to vector<8x16xf32>
    %141 = arith.addf %139, %140 : vector<8x16xf32>
    %142 = vector.extract_strided_slice %130 {offsets = [0, 16], sizes = [8, 16], strides = [1, 1]} : vector<8x48xf32> to vector<8x16xf32>
    %143 = vector.extract_strided_slice %131 {offsets = [0, 16], sizes = [8, 16], strides = [1, 1]} : vector<8x48xf32> to vector<8x16xf32>
    %144 = arith.addf %142, %143 : vector<8x16xf32>
    %cst_48 = arith.constant 5.000000e-01 : f32
    %145 = vector.broadcast %cst_48 : f32 to vector<8x16xf32>
    %146 = arith.mulf %145, %144 : vector<8x16xf32>
    %147 = math.tanh %146 : vector<8x16xf32>
    %cst_49 = arith.constant 5.000000e-01 : f32
    %148 = vector.broadcast %cst_49 : f32 to vector<8x16xf32>
    %149 = arith.mulf %148, %147 : vector<8x16xf32>
    %cst_50 = arith.constant 5.000000e-01 : f32
    %150 = vector.broadcast %cst_50 : f32 to vector<8x16xf32>
    %151 = arith.addf %149, %150 : vector<8x16xf32>
    %152 = vector.extract_strided_slice %130 {offsets = [0, 32], sizes = [8, 16], strides = [1, 1]} : vector<8x48xf32> to vector<8x16xf32>
    %153 = vector.extract_strided_slice %131 {offsets = [0, 32], sizes = [8, 16], strides = [1, 1]} : vector<8x48xf32> to vector<8x16xf32>
    %154 = vector.broadcast %15 : vector<1x16xf32> to vector<8x16xf32>
    %155 = arith.addf %153, %154 : vector<8x16xf32>
    %156 = arith.mulf %141, %155 : vector<8x16xf32>
    %157 = arith.addf %152, %156 : vector<8x16xf32>
    %158 = math.tanh %157 : vector<8x16xf32>
    %cst_51 = arith.constant 1.000000e+00 : f32
    %159 = vector.broadcast %cst_51 : f32 to vector<8x16xf32>
    %160 = arith.subf %159, %151 : vector<8x16xf32>
    %161 = arith.mulf %160, %158 : vector<8x16xf32>
    %162 = arith.mulf %151, %91 : vector<8x16xf32>
    %163 = arith.addf %161, %162 : vector<8x16xf32>
    %164 = tpu.concatenate %91, %163 in 0 : vector<8x16xf32>, vector<8x16xf32> -> vector<16x16xf32>
    %c0_52 = arith.constant 0 : index
    %c0_53 = arith.constant 0 : index
    %165 = vector.load %arg9[%c0_52, %c0_53] : memref<16x32xf32, #tpu.memory_space<vmem>>, vector<16x32xf32>
    %cst_54 = arith.constant dense<0.000000e+00> : vector<16x32xf32>
    %166 = tpu.matmul %164, %165, %cst_54 {dimension_numbers = #tpu.dot_dimension_numbers<[1], [0], [0], [1], [0, 0, 1, 1], [], []>} : vector<16x16xf32>, vector<16x32xf32>, vector<16x32xf32> -> vector<16x32xf32>
    %c0_55 = arith.constant 0 : index
    %c0_56 = arith.constant 0 : index
    %167 = vector.load %arg10[%c0_55, %c0_56] : memref<1x32xf32, #tpu.memory_space<vmem>>, vector<1x32xf32>
    %168 = vector.broadcast %167 : vector<1x32xf32> to vector<16x32xf32>
    %169 = arith.addf %166, %168 : vector<16x32xf32>
    %c0_57 = arith.constant 0 : index
    %c0_58 = arith.constant 0 : index
    %170 = vector.load %arg11[%c0_57, %c0_58] : memref<16x32xf32, #tpu.memory_space<vmem>>, vector<16x32xf32>
    tpu.vector_store %arg11[%c0_57, %c0_58], %169 {strides = array<i32>} : memref<16x32xf32, #tpu.memory_space<vmem>>, vector<16x32xf32>,
    %c0_59 = arith.constant 0 : index
    %c0_60 = arith.constant 0 : index
    %c0_61 = arith.constant 0 : index
    %171 = vector.load %arg12[%c0_59, %c0_60, %c0_61] : memref<2x8x16xf32, #tpu.memory_space<vmem>>, vector<1x8x16xf32>
    %172 = vector.shape_cast %171 : vector<1x8x16xf32> to vector<8x16xf32>
    %173 = vector.shape_cast %125 : vector<8x16xf32> to vector<1x8x16xf32>
    tpu.vector_store %arg12[%c0_59, %c0_60, %c0_61], %173 {strides = array<i32>} : memref<2x8x16xf32, #tpu.memory_space<vmem>>, vector<1x8x16xf32>,
    %c1_62 = arith.constant 1 : index
    %c0_63 = arith.constant 0 : index
    %c0_64 = arith.constant 0 : index
    %174 = vector.load %arg12[%c1_62, %c0_63, %c0_64] : memref<2x8x16xf32, #tpu.memory_space<vmem>>, vector<1x8x16xf32>
    %175 = vector.shape_cast %174 : vector<1x8x16xf32> to vector<8x16xf32>
    %176 = vector.shape_cast %163 : vector<8x16xf32> to vector<1x8x16xf32>
    tpu.vector_store %arg12[%c1_62, %c0_63, %c0_64], %176 {strides = array<i32>} : memref<2x8x16xf32, #tpu.memory_space<vmem>>, vector<1x8x16xf32>,
    return
  }
}

</mosaic_0001>

<llo_original>
// kernel: tpu_custom_call.1
$region0: #{tpu_custom_call.1}
  #allocation0 [shape = 'u32[]', space=smem, size = 0x4, offset = 0x4, fixed_abs, tag = 'smem constant byte address 0x4 - core index']
  #allocation1 [shape = 'u32[144,128]{1,0:T(1,128)}', space=vmem, size = 0x12000, scoped, tag = 'internal scratch']
  %s0 = inlined_call_operand.vmem [shape: s32[16,1], index: 0, kind: input, shape index: {}]
  %s1 = inlined_call_operand.vmem [shape: f32[32,48], index: 1, kind: input, shape index: {}]
  %s2 = inlined_call_operand.hbm [shape: f32[2,8,16], index: 2, kind: input, shape index: {}, may-alias: {2,12}]
  %s3 = inlined_call_operand.vmem [shape: f32[16,48], index: 3, kind: input, shape index: {}]
  %s4 = inlined_call_operand.vmem [shape: f32[1,48], index: 4, kind: input, shape index: {}]
  %s5 = inlined_call_operand.vmem [shape: f32[1,16], index: 5, kind: input, shape index: {}]
  %s6 = inlined_call_operand.hbm [shape: f32[32,96], index: 6, kind: input, shape index: {}]
  %s7 = inlined_call_operand.vmem [shape: f32[1,48], index: 7, kind: input, shape index: {}]
  %s8 = inlined_call_operand.vmem [shape: f32[1,16], index: 8, kind: input, shape index: {}]
  %s9 = inlined_call_operand.hbm [shape: f32[16,32], index: 9, kind: input, shape index: {}]
  %s10 = inlined_call_operand.vmem [shape: f32[1,32], index: 10, kind: input, shape index: {}]
  %s11 = inlined_call_operand.hbm [shape: f32[16,32], index: 11, kind: output, shape index: {0}]
  %s12 = inlined_call_operand.hbm [shape: f32[2,8,16], index: 12, kind: output, shape index: {1}, may-alias: {2,12}]
  %13 = xla_tuple %s11, %s12
  %s14 = sld [smem:[#allocation0]]
  $region74: #{tpu_custom_call.1} parent=0
    _
  %s16 = ssub.s32 1, %s14
  %s17 = scalar_select 0, %s16, %s14
  $region1: #{tpu_custom_call.1} parent=0
    #allocation2 [shape = 'u8[8192]{0}', space=vmem, size = 0x2000, scoped, tag = 'input window, operand 2, single buffered']
    #allocation3 [shape = 's32[1]{0}', space=sflag, size = 0x4, scoped, tag = 'scoped memory for tpu_custom_call.1']
    #allocation4 [shape = 's32[1]{0}', space=sflag, size = 0x4, scoped, tag = 'scoped memory for tpu_custom_call.1']
    #allocation5 [shape = 'u8[16384]{0}', space=vmem, size = 0x4000, scoped, tag = 'input window, operand 6, single buffered']
    #allocation6 [shape = 's32[1]{0}', space=sflag, size = 0x4, scoped, tag = 'scoped memory for tpu_custom_call.1']
    #allocation7 [shape = 'u8[8192]{0}', space=vmem, size = 0x2000, scoped, tag = 'input window, operand 9, single buffered']
    #allocation8 [shape = 'u8[8192]{0}', space=vmem, size = 0x2000, scoped, tag = 'output window, operand 0, single buffered']
    #allocation9 [shape = 'u8[8192]{0}', space=vmem, size = 0x2000, scoped, tag = 'output window, operand 1, single buffered']
    #allocation10 [shape = 's32[1]{0}', space=sflag, size = 0x4, scoped, tag = 'scoped memory for tpu_custom_call.1']
    %18 = vsyncpa [#allocation3], 0
    %19 = vsyncpa [#allocation6], 0
    %20 = vsyncpa [#allocation4], 0
    %21 = vsyncpa [#allocation10], 0
    // Predicated region
    $region2: #{tpu_custom_call.1} parent=1 // pred_check
      _
    $region3: #{tpu_custom_call.1} parent=1 // pred_check_branch
      %23 = sbr.rel (0) target = $region5
    $region4: #{tpu_custom_call.1} parent=1 // pred_region
      _
    $region5: #{tpu_custom_call.1} parent=1 // pred_fallthru
      _
    // Predicated region
    $region6: #{tpu_custom_call.1} parent=1 // pred_check
      _
    $region7: #{tpu_custom_call.1} parent=1 // pred_check_branch
      %25 = sbr.rel (0) target = $region9
    $region8: #{tpu_custom_call.1} parent=1 // pred_region
      _
    $region9: #{tpu_custom_call.1} parent=1 // pred_fallthru
      _
    // Predicated region
    $region10: #{tpu_custom_call.1} parent=1 // pred_check
      _
    $region11: #{tpu_custom_call.1} parent=1 // pred_check_branch
      %27 = sbr.rel (0) target = $region13
    $region12: #{tpu_custom_call.1} parent=1 // pred_region
      %s29 = ssub.s32 256, 256
      %30 = vsyncadd [#allocation3], %s29
      %s31 = sshll.u32 [#allocation2], 4
      %s32 = int_to_ptr.vmem [resolvable:$true] %s31
      %37 = dma.hbm_to_vmem [thread:$0]  %s2, 256, %s32, [#allocation3], 128, 128, 8
    $region13: #{tpu_custom_call.1} parent=1 // pred_fallthru
      _
    // Predicated region
    $region14: #{tpu_custom_call.1} parent=1 // pred_check
      _
    $region15: #{tpu_custom_call.1} parent=1 // pred_check_branch
      %39 = sbr.rel (0) target = $region17
    $region16: #{tpu_custom_call.1} parent=1 // pred_region
      _
    $region17: #{tpu_custom_call.1} parent=1 // pred_fallthru
      _
    // Predicated region
    $region18: #{tpu_custom_call.1} parent=1 // pred_check
      _
    $region19: #{tpu_custom_call.1} parent=1 // pred_check_branch
      %41 = sbr.rel (0) target = $region21
    $region20: #{tpu_custom_call.1} parent=1 // pred_region
      _
    $region21: #{tpu_custom_call.1} parent=1 // pred_fallthru
      _
    // Predicated region
    $region22: #{tpu_custom_call.1} parent=1 // pred_check
      _
    $region23: #{tpu_custom_call.1} parent=1 // pred_check_branch
      %43 = sbr.rel (0) target = $region25
    $region24: #{tpu_custom_call.1} parent=1 // pred_region
      _
    $region25: #{tpu_custom_call.1} parent=1 // pred_fallthru
      _
    // Predicated region
    $region26: #{tpu_custom_call.1} parent=1 // pred_check
      _
    $region27: #{tpu_custom_call.1} parent=1 // pred_check_branch
      %45 = sbr.rel (0) target = $region29
    $region28: #{tpu_custom_call.1} parent=1 // pred_region
      %s47 = ssub.s32 512, 512
      %48 = vsyncadd [#allocation6], %s47
      %s49 = sshll.u32 [#allocation5], 4
      %s50 = int_to_ptr.vmem [resolvable:$true] %s49
      %55 = dma.hbm_to_vmem [thread:$0]  %s6, 512, %s50, [#allocation6], 128, 128, 8
    $region29: #{tpu_custom_call.1} parent=1 // pred_fallthru
      _
    // Predicated region
    $region30: #{tpu_custom_call.1} parent=1 // pred_check
      _
    $region31: #{tpu_custom_call.1} parent=1 // pred_check_branch
      %57 = sbr.rel (0) target = $region33
    $region32: #{tpu_custom_call.1} parent=1 // pred_region
      _
    $region33: #{tpu_custom_call.1} parent=1 // pred_fallthru
      _
    // Predicated region
    $region34: #{tpu_custom_call.1} parent=1 // pred_check
      _
    $region35: #{tpu_custom_call.1} parent=1 // pred_check_branch
      %59 = sbr.rel (0) target = $region37
    $region36: #{tpu_custom_call.1} parent=1 // pred_region
      _
    $region37: #{tpu_custom_call.1} parent=1 // pred_fallthru
      _
    // Predicated region
    $region38: #{tpu_custom_call.1} parent=1 // pred_check
      _
    $region39: #{tpu_custom_call.1} parent=1 // pred_check_branch
      %61 = sbr.rel (0) target = $region41
    $region40: #{tpu_custom_call.1} parent=1 // pred_region
      %s63 = ssub.s32 256, 256
      %64 = vsyncadd [#allocation6], %s63
      %s65 = sshll.u32 [#allocation7], 4
      %s66 = int_to_ptr.vmem [resolvable:$true] %s65
      %71 = dma.hbm_to_vmem [thread:$0]  %s9, 256, %s66, [#allocation6], 128, 128, 8
    $region41: #{tpu_custom_call.1} parent=1 // pred_fallthru
      _
    // Predicated region
    $region42: #{tpu_custom_call.1} parent=1 // pred_check
      _
    $region43: #{tpu_custom_call.1} parent=1 // pred_check_branch
      %73 = sbr.rel (0) target = $region45
    $region44: #{tpu_custom_call.1} parent=1 // pred_region
      _
    $region45: #{tpu_custom_call.1} parent=1 // pred_fallthru
      _
    // Predicated region
    $region46: #{tpu_custom_call.1} parent=1 // pred_check
      _
    $region47: #{tpu_custom_call.1} parent=1 // pred_check_branch
      %75 = sbr.rel (0) target = $region49
    $region48: #{tpu_custom_call.1} parent=1 // pred_region
      %76 = dma.done [#allocation3], 256
    $region49: #{tpu_custom_call.1} parent=1 // pred_fallthru
      _
    // Predicated region
    $region50: #{tpu_custom_call.1} parent=1 // pred_check
      _
    $region51: #{tpu_custom_call.1} parent=1 // pred_check_branch
      %78 = sbr.rel (0) target = $region53
    $region52: #{tpu_custom_call.1} parent=1 // pred_region
      %79 = dma.done [#allocation6], 512
    $region53: #{tpu_custom_call.1} parent=1 // pred_fallthru
      _
    // Predicated region
    $region54: #{tpu_custom_call.1} parent=1 // pred_check
      _
    $region55: #{tpu_custom_call.1} parent=1 // pred_check_branch
      %81 = sbr.rel (0) target = $region57
    $region56: #{tpu_custom_call.1} parent=1 // pred_region
      %82 = dma.done [#allocation6], 256
    $region57: #{tpu_custom_call.1} parent=1 // pred_fallthru
      _
    %v83 = vld [vmem:[%s0] sm:$0xff]
    %v84 = vld [vmem:[%s0 + $0x8] sm:$0xff]
    %v85 = vlaneseq
    %v86 = vand.u32 %v85, 127
    %87 = vset.pattern.permute.xlu0 0
    %88 = vperm.xlu0 %87, %v83
    %v89 = vpop.permute.xlu0 %88
    %90 = vset.pattern.permute.xlu0 0
    %91 = vperm.xlu0 %90, %v84
    %v92 = vpop.permute.xlu0 %91
    %vm93 = vcmp.eq.s32.totalorder %v89, %v86
    %vm94 = vcmp.eq.s32.totalorder %v92, %v86
    %v95 = vsel %vm93, 1, 0
    %v96 = vsel %vm94, 1, 0
    %v97 = vcvt.s32.f32 %v95
    %v98 = vcvt.s32.f32 %v96
    %v99 = vld [vmem:[%s1] sm:$0xff]
    %v100 = vld [vmem:[%s1 + $0x8] sm:$0xff]
    %v101 = vld [vmem:[%s1 + $0x10] sm:$0xff]
    %v102 = vld [vmem:[%s1 + $0x18] sm:$0xff]
    %v103 = vld [vmem:[%s4] sm:$0x1]
    %v105 = vlaneseq
    %v106 = vshrl.u32 %v105, 7
    %v107 = vsub.s32 0, %v106
    %v108 = vrot.slane %v103, %v107
    %vm110 = vcmask 261120
    %v112 = vsel %vm110, %v97, 0
    %v115 = vsel %vm110, %v98, 0
    %117 = vmatprep.subr.mxu0 0.0
    %118 = vmatpush1.msra.mxu0 0.0
    %119 = vmatprep.subr.mxu0 0.0
    %120 = vmatpush1.msra.mxu0 0.0
    %121 = vmatprep.subr.mxu0 0.0
    %122 = vmatpush1.msra.mxu0 0.0
    %123 = vmatprep.subr.mxu0 0.0
    %124 = vmatpush1.msra.mxu0 0.0
    %125 = vmatprep.subr.mxu0 0.0
    %126 = vmatpush1.msra.mxu0 0.0
    %127 = vmatprep.subr.mxu0 0.0
    %128 = vmatpush1.msra.mxu0 0.0
    %129 = vmatprep.subr.mxu0 0.0
    %130 = vmatpush1.msra.mxu0 0.0
    %131 = vmatprep.subr.mxu0 0.0
    %132 = vmatpush1.msra.mxu0 0.0
    %133 = vmatprep.subr.mxu0 0.0
    %134 = vmatpush1.msra.mxu0 0.0
    %135 = vmatprep.subr.mxu0 0.0
    %136 = vmatpush1.msra.mxu0 0.0
    %137 = vmatprep.subr.mxu0 0.0
    %138 = vmatpush1.msra.mxu0 0.0
    %139 = vmatprep.subr.mxu0 0.0
    %140 = vmatpush1.msra.mxu0 0.0
    %141 = vmatprep.subr.mxu0 0.0
    %142 = vmatpush1.msra.mxu0 %v102
    %143 = vmatprep.subr.mxu0 0.0
    %144 = vmatpush1.msra.mxu0 %v101
    %145 = vmatprep.subr.mxu0 0.0
    %146 = vmatpush1.msra.mxu0 %v100
    %147 = vmatprep.subr.mxu0 0.0
    %148 = vmatpush1.msra.mxu0 %v99
    %149 = vmatprep.subr.mxu0 0.0
    %150 = vmatpush2.msra.mxu0 0.0
    %151 = vmatprep.subr.mxu0 0.0
    %152 = vmatpush2.msra.mxu0 0.0
    %153 = vmatprep.subr.mxu0 0.0
    %154 = vmatpush2.msra.mxu0 0.0
    %155 = vmatprep.subr.mxu0 0.0
    %156 = vmatpush2.msra.mxu0 0.0
    %157 = vmatprep.subr.mxu0 0.0
    %158 = vmatpush2.msra.mxu0 0.0
    %159 = vmatprep.subr.mxu0 0.0
    %160 = vmatpush2.msra.mxu0 0.0
    %161 = vmatprep.subr.mxu0 0.0
    %162 = vmatpush2.msra.mxu0 0.0
    %163 = vmatprep.subr.mxu0 0.0
    %164 = vmatpush2.msra.mxu0 0.0
    %165 = vmatprep.subr.mxu0 0.0
    %166 = vmatpush2.msra.mxu0 0.0
    %167 = vmatprep.subr.mxu0 0.0
    %168 = vmatpush2.msra.mxu0 0.0
    %169 = vmatprep.subr.mxu0 0.0
    %170 = vmatpush2.msra.mxu0 0.0
    %171 = vmatprep.subr.mxu0 0.0
    %172 = vmatpush2.msra.mxu0 0.0
    %173 = vmatprep.subr.mxu0 0.0
    %174 = vmatpush2.msra.mxu0 0.0
    %175 = vmatprep.subr.mxu0 0.0
    %176 = vmatpush2.msra.mxu0 0.0
    %177 = vmatprep.subr.mxu0 0.0
    %178 = vmatpush2.msra.mxu0 0.0
    %179 = vmatprep.subr.mxu0 0.0
    %180 = vmatpush2.msra.mxu0 0.0
    %181 = vmatprep.mubr.f32.mxu0 0.0
    %182 = vmatmul.mubr.f32.gmra.mxu0 %v112
    %v183 = vpop.f32.mrf.mxu0
    %v184 = vadd.f32 %v108, %v183
    %v185 = vpop.f32.mrf.mxu0
    %186 = vmatprep.mubr.f32.mxu0 0.0
    %187 = vmatmul.mubr.f32.gmra.mxu0 %v115
    %v188 = vpop.f32.mrf.mxu0
    %v189 = vadd.f32 %v108, %v188
    %v190 = vpop.f32.mrf.mxu0
    %191 = vdwg.mxu0
    %v192 = vld [vmem:[%s3] sm:$0xff]
    %v193 = vld [vmem:[%s3 + $0x8] sm:$0xff]
    %v194 = vld [vmem:[%s5] sm:$0x1]
    %v195 = vld [vmem:[#allocation5] sm:$0xff]
    %v196 = vld [vmem:[#allocation5 + $0x8] sm:$0xff]
    %v197 = vld [vmem:[#allocation5 + $0x10] sm:$0xff]
    %v198 = vld [vmem:[#allocation5 + $0x18] sm:$0xff]
    %v199 = vld [vmem:[%s7] sm:$0x1]
    %v200 = vld [vmem:[%s8] sm:$0x1]
    %v201 = vld [vmem:[#allocation2] sm:$0xff]
    %s202 = scalar_lea.vmem [#allocation2], 8
    %v203 = vld [vmem:[%s202] sm:$0xff]
    %vm204 = vcmask 130048
    %v206 = vsel %vm204, %v201, 0
    %208 = vmatprep.subr.mxu0 0.0
    %209 = vmatpush1.msra.mxu0 0.0
    %210 = vmatprep.subr.mxu0 0.0
    %211 = vmatpush1.msra.mxu0 0.0
    %212 = vmatprep.subr.mxu0 0.0
    %213 = vmatpush1.msra.mxu0 0.0
    %214 = vmatprep.subr.mxu0 0.0
    %215 = vmatpush1.msra.mxu0 0.0
    %216 = vmatprep.subr.mxu0 0.0
    %217 = vmatpush1.msra.mxu0 0.0
    %218 = vmatprep.subr.mxu0 0.0
    %219 = vmatpush1.msra.mxu0 0.0
    %220 = vmatprep.subr.mxu0 0.0
    %221 = vmatpush1.msra.mxu0 0.0
    %222 = vmatprep.subr.mxu0 0.0
    %223 = vmatpush1.msra.mxu0 0.0
    %224 = vmatprep.subr.mxu0 0.0
    %225 = vmatpush1.msra.mxu0 0.0
    %226 = vmatprep.subr.mxu0 0.0
    %227 = vmatpush1.msra.mxu0 0.0
    %228 = vmatprep.subr.mxu0 0.0
    %229 = vmatpush1.msra.mxu0 0.0
    %230 = vmatprep.subr.mxu0 0.0
    %231 = vmatpush1.msra.mxu0 0.0
    %232 = vmatprep.subr.mxu0 0.0
    %233 = vmatpush1.msra.mxu0 0.0
    %234 = vmatprep.subr.mxu0 0.0
    %235 = vmatpush1.msra.mxu0 0.0
    %236 = vmatprep.subr.mxu0 0.0
    %237 = vmatpush1.msra.mxu0 %v193
    %238 = vmatprep.subr.mxu0 0.0
    %239 = vmatpush1.msra.mxu0 %v192
    %240 = vmatprep.subr.mxu0 0.0
    %241 = vmatpush2.msra.mxu0 0.0
    %242 = vmatprep.subr.mxu0 0.0
    %243 = vmatpush2.msra.mxu0 0.0
    %244 = vmatprep.subr.mxu0 0.0
    %245 = vmatpush2.msra.mxu0 0.0
    %246 = vmatprep.subr.mxu0 0.0
    %247 = vmatpush2.msra.mxu0 0.0
    %248 = vmatprep.subr.mxu0 0.0
    %249 = vmatpush2.msra.mxu0 0.0
    %250 = vmatprep.subr.mxu0 0.0
    %251 = vmatpush2.msra.mxu0 0.0
    %252 = vmatprep.subr.mxu0 0.0
    %253 = vmatpush2.msra.mxu0 0.0
    %254 = vmatprep.subr.mxu0 0.0
    %255 = vmatpush2.msra.mxu0 0.0
    %256 = vmatprep.subr.mxu0 0.0
    %257 = vmatpush2.msra.mxu0 0.0
    %258 = vmatprep.subr.mxu0 0.0
    %259 = vmatpush2.msra.mxu0 0.0
    %260 = vmatprep.subr.mxu0 0.0
    %261 = vmatpush2.msra.mxu0 0.0
    %262 = vmatprep.subr.mxu0 0.0
    %263 = vmatpush2.msra.mxu0 0.0
    %264 = vmatprep.subr.mxu0 0.0
    %265 = vmatpush2.msra.mxu0 0.0
    %266 = vmatprep.subr.mxu0 0.0
    %267 = vmatpush2.msra.mxu0 0.0
    %268 = vmatprep.subr.mxu0 0.0
    %269 = vmatpush2.msra.mxu0 0.0
    %270 = vmatprep.subr.mxu0 0.0
    %271 = vmatpush2.msra.mxu0 0.0
    %272 = vmatprep.mubr.f32.mxu0 0.0
    %273 = vmatmul.mubr.f32.gmra.mxu0 %v206
    %v274 = vpop.f32.mrf.mxu0
    %v275 = vadd.f32 0.0, %v274
    %v276 = vpop.f32.mrf.mxu0
    %277 = vdwg.mxu0
    %v278 = vadd.f32 %v184, %v275
    %v279 = vmul.f32 %v278, 0.5
    %v280 = vtanh.pop %v279
    %v281 = vmul.f32 %v280, 0.5
    %v282 = vadd.f32 %v281, 0.5
    %v284 = vlaneseq
    %v285 = vshrl.u32 %v284, 7
    %v286 = vsub.s32 0, %v285
    %v287 = vrot.slane %v194, %v286
    %288 = vrot.lane.b32.xlu0 %v287, 32
    %v289 = vpop.permute.xlu0 %288
    %v291 = vadd.f32 %v275, %v289
    %293 = vrot.lane.b32.xlu0 %v291, 96
    %v294 = vpop.permute.xlu0 %293
    %v296 = vmul.f32 %v282, %v294
    %298 = vrot.lane.b32.xlu0 %v296, 32
    %v299 = vpop.permute.xlu0 %298
    %v301 = vadd.f32 %v184, %v299
    %v302 = vtanh.pop %v301
    %v303 = vsub.f32 1.0, %v282
    %305 = vrot.lane.b32.xlu0 %v302, 112
    %v306 = vpop.permute.xlu0 %305
    %v308 = vmul.f32 %v303, %v306
    %309 = vrot.lane.b32.xlu0 %v201, 16
    %v310 = vpop.permute.xlu0 %309
    %v312 = vmul.f32 %v282, %v310
    %v313 = vadd.f32 %v308, %v312
    %315 = vrot.lane.b32.xlu0 %v313, 112
    %v316 = vpop.permute.xlu0 %315
    %319 = vrot.lane.b32.xlu0 %v203, 16
    %v320 = vpop.permute.xlu0 %319
    %v322 = vsel %vm204, %v316, %v320
    %v324 = vsel %vm110, %v322, 0
    %326 = vmatprep.subr.mxu0 0.0
    %327 = vmatpush1.msra.mxu0 0.0
    %328 = vmatprep.subr.mxu0 0.0
    %329 = vmatpush1.msra.mxu0 0.0
    %330 = vmatprep.subr.mxu0 0.0
    %331 = vmatpush1.msra.mxu0 0.0
    %332 = vmatprep.subr.mxu0 0.0
    %333 = vmatpush1.msra.mxu0 0.0
    %334 = vmatprep.subr.mxu0 0.0
    %335 = vmatpush1.msra.mxu0 0.0
    %336 = vmatprep.subr.mxu0 0.0
    %337 = vmatpush1.msra.mxu0 0.0
    %338 = vmatprep.subr.mxu0 0.0
    %339 = vmatpush1.msra.mxu0 0.0
    %340 = vmatprep.subr.mxu0 0.0
    %341 = vmatpush1.msra.mxu0 0.0
    %342 = vmatprep.subr.mxu0 0.0
    %343 = vmatpush1.msra.mxu0 0.0
    %344 = vmatprep.subr.mxu0 0.0
    %345 = vmatpush1.msra.mxu0 0.0
    %346 = vmatprep.subr.mxu0 0.0
    %347 = vmatpush1.msra.mxu0 0.0
    %348 = vmatprep.subr.mxu0 0.0
    %349 = vmatpush1.msra.mxu0 0.0
    %350 = vmatprep.subr.mxu0 0.0
    %351 = vmatpush1.msra.mxu0 %v198
    %352 = vmatprep.subr.mxu0 0.0
    %353 = vmatpush1.msra.mxu0 %v197
    %354 = vmatprep.subr.mxu0 0.0
    %355 = vmatpush1.msra.mxu0 %v196
    %356 = vmatprep.subr.mxu0 0.0
    %357 = vmatpush1.msra.mxu0 %v195
    %358 = vmatprep.subr.mxu0 0.0
    %359 = vmatpush2.msra.mxu0 0.0
    %360 = vmatprep.subr.mxu0 0.0
    %361 = vmatpush2.msra.mxu0 0.0
    %362 = vmatprep.subr.mxu0 0.0
    %363 = vmatpush2.msra.mxu0 0.0
    %364 = vmatprep.subr.mxu0 0.0
    %365 = vmatpush2.msra.mxu0 0.0
    %366 = vmatprep.subr.mxu0 0.0
    %367 = vmatpush2.msra.mxu0 0.0
    %368 = vmatprep.subr.mxu0 0.0
    %369 = vmatpush2.msra.mxu0 0.0
    %370 = vmatprep.subr.mxu0 0.0
    %371 = vmatpush2.msra.mxu0 0.0
    %372 = vmatprep.subr.mxu0 0.0
    %373 = vmatpush2.msra.mxu0 0.0
    %374 = vmatprep.subr.mxu0 0.0
    %375 = vmatpush2.msra.mxu0 0.0
    %376 = vmatprep.subr.mxu0 0.0
    %377 = vmatpush2.msra.mxu0 0.0
    %378 = vmatprep.subr.mxu0 0.0
    %379 = vmatpush2.msra.mxu0 0.0
    %380 = vmatprep.subr.mxu0 0.0
    %381 = vmatpush2.msra.mxu0 0.0
    %382 = vmatprep.subr.mxu0 0.0
    %383 = vmatpush2.msra.mxu0 0.0
    %384 = vmatprep.subr.mxu0 0.0
    %385 = vmatpush2.msra.mxu0 0.0
    %386 = vmatprep.subr.mxu0 0.0
    %387 = vmatpush2.msra.mxu0 0.0
    %388 = vmatprep.subr.mxu0 0.0
    %389 = vmatpush2.msra.mxu0 0.0
    %390 = vmatprep.mubr.f32.mxu0 0.0
    %391 = vmatmul.mubr.f32.gmra.mxu0 %v324
    %v392 = vpop.f32.mrf.mxu0
    %v393 = vadd.f32 0.0, %v392
    %v394 = vpop.f32.mrf.mxu0
    %395 = vdwg.mxu0
    %v397 = vlaneseq
    %v398 = vshrl.u32 %v397, 7
    %v399 = vsub.s32 0, %v398
    %v400 = vrot.slane %v199, %v399
    %v402 = vadd.f32 %v393, %v400
    %404 = vrot.lane.b32.xlu0 %v393, 80
    %v405 = vpop.permute.xlu0 %404
    %v407 = vadd.f32 %v402, %v405
    %v408 = vmul.f32 %v407, 0.5
    %v409 = vtanh.pop %v408
    %v410 = vmul.f32 %v409, 0.5
    %v411 = vadd.f32 %v410, 0.5
    %v413 = vlaneseq
    %v414 = vshrl.u32 %v413, 7
    %v415 = vsub.s32 0, %v414
    %v416 = vrot.slane %v200, %v415
    %417 = vrot.lane.b32.xlu0 %v416, 80
    %v418 = vpop.permute.xlu0 %417
    %v420 = vadd.f32 %v393, %v418
    %422 = vrot.lane.b32.xlu0 %v420, 48
    %v423 = vpop.permute.xlu0 %422
    %v425 = vmul.f32 %v411, %v423
    %427 = vrot.lane.b32.xlu0 %v425, 32
    %v428 = vpop.permute.xlu0 %427
    %v430 = vadd.f32 %v402, %v428
    %v431 = vtanh.pop %v430
    %v432 = vsub.f32 1.0, %v411
    %434 = vrot.lane.b32.xlu0 %v431, 112
    %v435 = vpop.permute.xlu0 %434
    %v437 = vmul.f32 %v432, %v435
    %v438 = vmul.f32 %v411, %v320
    %v439 = vadd.f32 %v437, %v438
    %v440 = vsel %vm204, %v316, 0
    %442 = vmatprep.subr.mxu0 0.0
    %443 = vmatpush1.msra.mxu0 0.0
    %444 = vmatprep.subr.mxu0 0.0
    %445 = vmatpush1.msra.mxu0 0.0
    %446 = vmatprep.subr.mxu0 0.0
    %447 = vmatpush1.msra.mxu0 0.0
    %448 = vmatprep.subr.mxu0 0.0
    %449 = vmatpush1.msra.mxu0 0.0
    %450 = vmatprep.subr.mxu0 0.0
    %451 = vmatpush1.msra.mxu0 0.0
    %452 = vmatprep.subr.mxu0 0.0
    %453 = vmatpush1.msra.mxu0 0.0
    %454 = vmatprep.subr.mxu0 0.0
    %455 = vmatpush1.msra.mxu0 0.0
    %456 = vmatprep.subr.mxu0 0.0
    %457 = vmatpush1.msra.mxu0 0.0
    %458 = vmatprep.subr.mxu0 0.0
    %459 = vmatpush1.msra.mxu0 0.0
    %460 = vmatprep.subr.mxu0 0.0
    %461 = vmatpush1.msra.mxu0 0.0
    %462 = vmatprep.subr.mxu0 0.0
    %463 = vmatpush1.msra.mxu0 0.0
    %464 = vmatprep.subr.mxu0 0.0
    %465 = vmatpush1.msra.mxu0 0.0
    %466 = vmatprep.subr.mxu0 0.0
    %467 = vmatpush1.msra.mxu0 0.0
    %468 = vmatprep.subr.mxu0 0.0
    %469 = vmatpush1.msra.mxu0 0.0
    %470 = vmatprep.subr.mxu0 0.0
    %471 = vmatpush1.msra.mxu0 %v193
    %472 = vmatprep.subr.mxu0 0.0
    %473 = vmatpush1.msra.mxu0 %v192
    %474 = vmatprep.subr.mxu0 0.0
    %475 = vmatpush2.msra.mxu0 0.0
    %476 = vmatprep.subr.mxu0 0.0
    %477 = vmatpush2.msra.mxu0 0.0
    %478 = vmatprep.subr.mxu0 0.0
    %479 = vmatpush2.msra.mxu0 0.0
    %480 = vmatprep.subr.mxu0 0.0
    %481 = vmatpush2.msra.mxu0 0.0
    %482 = vmatprep.subr.mxu0 0.0
    %483 = vmatpush2.msra.mxu0 0.0
    %484 = vmatprep.subr.mxu0 0.0
    %485 = vmatpush2.msra.mxu0 0.0
    %486 = vmatprep.subr.mxu0 0.0
    %487 = vmatpush2.msra.mxu0 0.0
    %488 = vmatprep.subr.mxu0 0.0
    %489 = vmatpush2.msra.mxu0 0.0
    %490 = vmatprep.subr.mxu0 0.0
    %491 = vmatpush2.msra.mxu0 0.0
    %492 = vmatprep.subr.mxu0 0.0
    %493 = vmatpush2.msra.mxu0 0.0
    %494 = vmatprep.subr.mxu0 0.0
    %495 = vmatpush2.msra.mxu0 0.0
    %496 = vmatprep.subr.mxu0 0.0
    %497 = vmatpush2.msra.mxu0 0.0
    %498 = vmatprep.subr.mxu0 0.0
    %499 = vmatpush2.msra.mxu0 0.0
    %500 = vmatprep.subr.mxu0 0.0
    %501 = vmatpush2.msra.mxu0 0.0
    %502 = vmatprep.subr.mxu0 0.0
    %503 = vmatpush2.msra.mxu0 0.0
    %504 = vmatprep.subr.mxu0 0.0
    %505 = vmatpush2.msra.mxu0 0.0
    %506 = vmatprep.mubr.f32.mxu0 0.0
    %507 = vmatmul.mubr.f32.gmra.mxu0 %v440
    %v508 = vpop.f32.mrf.mxu0
    %v509 = vadd.f32 0.0, %v508
    %v510 = vpop.f32.mrf.mxu0
    %511 = vdwg.mxu0
    %v512 = vadd.f32 %v189, %v509
    %v513 = vmul.f32 %v512, 0.5
    %v514 = vtanh.pop %v513
    %v515 = vmul.f32 %v514, 0.5
    %v516 = vadd.f32 %v515, 0.5
    %v517 = vadd.f32 %v509, %v289
    %519 = vrot.lane.b32.xlu0 %v517, 96
    %v520 = vpop.permute.xlu0 %519
    %v522 = vmul.f32 %v516, %v520
    %524 = vrot.lane.b32.xlu0 %v522, 32
    %v525 = vpop.permute.xlu0 %524
    %v527 = vadd.f32 %v189, %v525
    %v528 = vtanh.pop %v527
    %v529 = vsub.f32 1.0, %v516
    %531 = vrot.lane.b32.xlu0 %v528, 112
    %v532 = vpop.permute.xlu0 %531
    %v534 = vmul.f32 %v529, %v532
    %v535 = vmul.f32 %v516, %v313
    %v536 = vadd.f32 %v534, %v535
    %538 = vrot.lane.b32.xlu0 %v536, 112
    %v539 = vpop.permute.xlu0 %538
    %v541 = vsel %vm204, %v539, %v439
    %v543 = vsel %vm110, %v541, 0
    %545 = vmatprep.subr.mxu0 0.0
    %546 = vmatpush1.msra.mxu0 0.0
    %547 = vmatprep.subr.mxu0 0.0
    %548 = vmatpush1.msra.mxu0 0.0
    %549 = vmatprep.subr.mxu0 0.0
    %550 = vmatpush1.msra.mxu0 0.0
    %551 = vmatprep.subr.mxu0 0.0
    %552 = vmatpush1.msra.mxu0 0.0
    %553 = vmatprep.subr.mxu0 0.0
    %554 = vmatpush1.msra.mxu0 0.0
    %555 = vmatprep.subr.mxu0 0.0
    %556 = vmatpush1.msra.mxu0 0.0
    %557 = vmatprep.subr.mxu0 0.0
    %558 = vmatpush1.msra.mxu0 0.0
    %559 = vmatprep.subr.mxu0 0.0
    %560 = vmatpush1.msra.mxu0 0.0
    %561 = vmatprep.subr.mxu0 0.0
    %562 = vmatpush1.msra.mxu0 0.0
    %563 = vmatprep.subr.mxu0 0.0
    %564 = vmatpush1.msra.mxu0 0.0
    %565 = vmatprep.subr.mxu0 0.0
    %566 = vmatpush1.msra.mxu0 0.0
    %567 = vmatprep.subr.mxu0 0.0
    %568 = vmatpush1.msra.mxu0 0.0
    %569 = vmatprep.subr.mxu0 0.0
    %570 = vmatpush1.msra.mxu0 %v198
    %571 = vmatprep.subr.mxu0 0.0
    %572 = vmatpush1.msra.mxu0 %v197
    %573 = vmatprep.subr.mxu0 0.0
    %574 = vmatpush1.msra.mxu0 %v196
    %575 = vmatprep.subr.mxu0 0.0
    %576 = vmatpush1.msra.mxu0 %v195
    %577 = vmatprep.subr.mxu0 0.0
    %578 = vmatpush2.msra.mxu0 0.0
    %579 = vmatprep.subr.mxu0 0.0
    %580 = vmatpush2.msra.mxu0 0.0
    %581 = vmatprep.subr.mxu0 0.0
    %582 = vmatpush2.msra.mxu0 0.0
    %583 = vmatprep.subr.mxu0 0.0
    %584 = vmatpush2.msra.mxu0 0.0
    %585 = vmatprep.subr.mxu0 0.0
    %586 = vmatpush2.msra.mxu0 0.0
    %587 = vmatprep.subr.mxu0 0.0
    %588 = vmatpush2.msra.mxu0 0.0
    %589 = vmatprep.subr.mxu0 0.0
    %590 = vmatpush2.msra.mxu0 0.0
    %591 = vmatprep.subr.mxu0 0.0
    %592 = vmatpush2.msra.mxu0 0.0
    %593 = vmatprep.subr.mxu0 0.0
    %594 = vmatpush2.msra.mxu0 0.0
    %595 = vmatprep.subr.mxu0 0.0
    %596 = vmatpush2.msra.mxu0 0.0
    %597 = vmatprep.subr.mxu0 0.0
    %598 = vmatpush2.msra.mxu0 0.0
    %599 = vmatprep.subr.mxu0 0.0
    %600 = vmatpush2.msra.mxu0 0.0
    %601 = vmatprep.subr.mxu0 0.0
    %602 = vmatpush2.msra.mxu0 0.0
    %603 = vmatprep.subr.mxu0 0.0
    %604 = vmatpush2.msra.mxu0 0.0
    %605 = vmatprep.subr.mxu0 0.0
    %606 = vmatpush2.msra.mxu0 0.0
    %607 = vmatprep.subr.mxu0 0.0
    %608 = vmatpush2.msra.mxu0 0.0
    %609 = vmatprep.mubr.f32.mxu0 0.0
    %610 = vmatmul.mubr.f32.gmra.mxu0 %v543
    %v611 = vpop.f32.mrf.mxu0
    %v612 = vadd.f32 0.0, %v611
    %v613 = vpop.f32.mrf.mxu0
    %614 = vdwg.mxu0
    %v615 = vadd.f32 %v612, %v400
    %617 = vrot.lane.b32.xlu0 %v612, 80
    %v618 = vpop.permute.xlu0 %617
    %v620 = vadd.f32 %v615, %v618
    %v621 = vmul.f32 %v620, 0.5
    %v622 = vtanh.pop %v621
    %v623 = vmul.f32 %v622, 0.5
    %v624 = vadd.f32 %v623, 0.5
    %v625 = vadd.f32 %v612, %v418
    %627 = vrot.lane.b32.xlu0 %v625, 48
    %v628 = vpop.permute.xlu0 %627
    %v630 = vmul.f32 %v624, %v628
    %632 = vrot.lane.b32.xlu0 %v630, 32
    %v633 = vpop.permute.xlu0 %632
    %v635 = vadd.f32 %v615, %v633
    %v636 = vtanh.pop %v635
    %v637 = vsub.f32 1.0, %v624
    %639 = vrot.lane.b32.xlu0 %v636, 112
    %v640 = vpop.permute.xlu0 %639
    %v642 = vmul.f32 %v637, %v640
    %v643 = vmul.f32 %v624, %v439
    %v644 = vadd.f32 %v642, %v643
    %v645 = vld [vmem:[#allocation7] sm:$0xff]
    %v646 = vld [vmem:[#allocation7 + $0x8] sm:$0xff]
    %v647 = vld [vmem:[%s10] sm:$0x1]
    %v649 = vlaneseq
    %v650 = vshrl.u32 %v649, 7
    %v651 = vsub.s32 0, %v650
    %v652 = vrot.slane %v647, %v651
    %656 = vrot.lane.b32.xlu0 %v439, 112
    %v657 = vpop.permute.xlu0 %656
    %658 = vrot.lane.b32.xlu0 %v644, 112
    %v659 = vpop.permute.xlu0 %658
    %v660 = vsel %vm204, %v657, 0
    %v662 = vsel %vm204, %v659, 0
    %664 = vmatprep.subr.mxu0 0.0
    %665 = vmatpush1.msra.mxu0 0.0
    %666 = vmatprep.subr.mxu0 0.0
    %667 = vmatpush1.msra.mxu0 0.0
    %668 = vmatprep.subr.mxu0 0.0
    %669 = vmatpush1.msra.mxu0 0.0
    %670 = vmatprep.subr.mxu0 0.0
    %671 = vmatpush1.msra.mxu0 0.0
    %672 = vmatprep.subr.mxu0 0.0
    %673 = vmatpush1.msra.mxu0 0.0
    %674 = vmatprep.subr.mxu0 0.0
    %675 = vmatpush1.msra.mxu0 0.0
    %676 = vmatprep.subr.mxu0 0.0
    %677 = vmatpush1.msra.mxu0 0.0
    %678 = vmatprep.subr.mxu0 0.0
    %679 = vmatpush1.msra.mxu0 0.0
    %680 = vmatprep.subr.mxu0 0.0
    %681 = vmatpush1.msra.mxu0 0.0
    %682 = vmatprep.subr.mxu0 0.0
    %683 = vmatpush1.msra.mxu0 0.0
    %684 = vmatprep.subr.mxu0 0.0
    %685 = vmatpush1.msra.mxu0 0.0
    %686 = vmatprep.subr.mxu0 0.0
    %687 = vmatpush1.msra.mxu0 0.0
    %688 = vmatprep.subr.mxu0 0.0
    %689 = vmatpush1.msra.mxu0 0.0
    %690 = vmatprep.subr.mxu0 0.0
    %691 = vmatpush1.msra.mxu0 0.0
    %692 = vmatprep.subr.mxu0 0.0
    %693 = vmatpush1.msra.mxu0 %v646
    %694 = vmatprep.subr.mxu0 0.0
    %695 = vmatpush1.msra.mxu0 %v645
    %696 = vmatprep.subr.mxu0 0.0
    %697 = vmatpush2.msra.mxu0 0.0
    %698 = vmatprep.subr.mxu0 0.0
    %699 = vmatpush2.msra.mxu0 0.0
    %700 = vmatprep.subr.mxu0 0.0
    %701 = vmatpush2.msra.mxu0 0.0
    %702 = vmatprep.subr.mxu0 0.0
    %703 = vmatpush2.msra.mxu0 0.0
    %704 = vmatprep.subr.mxu0 0.0
    %705 = vmatpush2.msra.mxu0 0.0
    %706 = vmatprep.subr.mxu0 0.0
    %707 = vmatpush2.msra.mxu0 0.0
    %708 = vmatprep.subr.mxu0 0.0
    %709 = vmatpush2.msra.mxu0 0.0
    %710 = vmatprep.subr.mxu0 0.0
    %711 = vmatpush2.msra.mxu0 0.0
    %712 = vmatprep.subr.mxu0 0.0
    %713 = vmatpush2.msra.mxu0 0.0
    %714 = vmatprep.subr.mxu0 0.0
    %715 = vmatpush2.msra.mxu0 0.0
    %716 = vmatprep.subr.mxu0 0.0
    %717 = vmatpush2.msra.mxu0 0.0
    %718 = vmatprep.subr.mxu0 0.0
    %719 = vmatpush2.msra.mxu0 0.0
    %720 = vmatprep.subr.mxu0 0.0
    %721 = vmatpush2.msra.mxu0 0.0
    %722 = vmatprep.subr.mxu0 0.0
    %723 = vmatpush2.msra.mxu0 0.0
    %724 = vmatprep.subr.mxu0 0.0
    %725 = vmatpush2.msra.mxu0 0.0
    %726 = vmatprep.subr.mxu0 0.0
    %727 = vmatpush2.msra.mxu0 0.0
    %728 = vmatprep.mubr.f32.mxu0 0.0
    %729 = vmatmul.mubr.f32.gmra.mxu0 %v660
    %v730 = vpop.f32.mrf.mxu0
    %v731 = vadd.f32 %v652, %v730
    %v732 = vpop.f32.mrf.mxu0
    %733 = vmatprep.mubr.f32.mxu0 0.0
    %734 = vmatmul.mubr.f32.gmra.mxu0 %v662
    %v735 = vpop.f32.mrf.mxu0
    %v736 = vadd.f32 %v652, %v735
    %v737 = vpop.f32.mrf.mxu0
    %738 = vdwg.mxu0
    %739 = vst.msk [vmem:[#allocation8] sm:$0xff] %vm110, %v731
    %740 = vst.msk [vmem:[#allocation8 + $0x8] sm:$0xff] %vm110, %v736
    %741 = vst.msk [vmem:[#allocation9] sm:$0xff] %vm204, %v539
    %s743 = scalar_lea.vmem [#allocation9], 8
    %744 = vst.msk [vmem:[%s743] sm:$0xff] %vm204, %v659
    // Predicated region
    $region58: #{tpu_custom_call.1} parent=1 // pred_check
      _
    $region59: #{tpu_custom_call.1} parent=1 // pred_check_branch
      %746 = sbr.rel (0) target = $region61
    $region60: #{tpu_custom_call.1} parent=1 // pred_region
      %s748 = ssub.s32 256, 256
      %749 = vsyncadd [#allocation4], %s748
      %s750 = sshll.u32 [#allocation8], 4
      %s751 = int_to_ptr.vmem [resolvable:$true] %s750
      %756 = dma.vmem_to_hbm [thread:$0]  %s751, 256, %s11, [#allocation4], 128, 128, 8
    $region61: #{tpu_custom_call.1} parent=1 // pred_fallthru
      _
    // Predicated region
    $region62: #{tpu_custom_call.1} parent=1 // pred_check
      _
    $region63: #{tpu_custom_call.1} parent=1 // pred_check_branch
      %758 = sbr.rel (0) target = $region65
    $region64: #{tpu_custom_call.1} parent=1 // pred_region
      %s760 = ssub.s32 256, 256
      %761 = vsyncadd [#allocation10], %s760
      %s762 = sshll.u32 [#allocation9], 4
      %s763 = int_to_ptr.vmem [resolvable:$true] %s762
      %768 = dma.vmem_to_hbm [thread:$0]  %s763, 256, %s12, [#allocation10], 128, 128, 8
    $region65: #{tpu_custom_call.1} parent=1 // pred_fallthru
      _
    // Predicated region
    $region66: #{tpu_custom_call.1} parent=1 // pred_check
      _
    $region67: #{tpu_custom_call.1} parent=1 // pred_check_branch
      %770 = sbr.rel (0) target = $region69
    $region68: #{tpu_custom_call.1} parent=1 // pred_region
      %771 = dma.done [#allocation4], 256
    $region69: #{tpu_custom_call.1} parent=1 // pred_fallthru
      _
    // Predicated region
    $region70: #{tpu_custom_call.1} parent=1 // pred_check
      _
    $region71: #{tpu_custom_call.1} parent=1 // pred_check_branch
      %773 = sbr.rel (0) target = $region73
    $region72: #{tpu_custom_call.1} parent=1 // pred_region
      %774 = dma.done [#allocation10], 256
    $region73: #{tpu_custom_call.1} parent=1 // pred_fallthru
      _
    %775 = vsyncpa [#allocation3], 1
    %776 = vsyncpa [#allocation6], 1
    %777 = vsyncpa [#allocation4], 1
    %778 = vsyncpa [#allocation10], 1

</llo_original>
